<compile_context>
chip_gen: v7x
topology: tpu7x:2x2x1
jax: 0.10.0
libtpu: 0.0.40
codegen_flags: <defaults>
</compile_context>

<pallas_src>
import functools

import numpy as np
import jax
import jax.numpy as jnp
from jax import lax
from jax.experimental import pallas as pl
from jax.experimental.pallas import tpu as pltpu


def _round_up(a, m):
    return (a + m - 1) // m * m


# ---------------------------------------------------------------------------
# Runtime probes (cached): physical VMEM capacity and pl.Buffered(1) support.
# ---------------------------------------------------------------------------
def _vmem_capacity_bytes():
    try:
        cap = getattr(pltpu.get_tpu_info(), "vmem_capacity_bytes", None)
        if cap:
            return int(cap)
    except Exception:
        pass
    return 64 * 1024 * 1024      # conservative fallback (v7x per-core VMEM)


_SINGLE_BUF_OK = None


def _probe_copy_kernel(x_ref, o_ref):
    o_ref[...] = x_ref[...]


def _single_buffer_supported():
    """True iff pl.Buffered(1) on a constant-index operand compiles and runs correctly."""
    global _SINGLE_BUF_OK
    if _SINGLE_BUF_OK is None:
        try:
            px = jnp.arange(8 * 128, dtype=jnp.float32).reshape(8, 128)
            out = pl.pallas_call(
                _probe_copy_kernel,
                out_shape=jax.ShapeDtypeStruct((16, 128), jnp.float32),
                grid=(2,),
                in_specs=[pl.BlockSpec((8, 128), lambda i: (0, 0),
                                       pipeline_mode=pl.Buffered(1))],
                out_specs=pl.BlockSpec((8, 128), lambda i: (i, 0)),
            )(px)
            _SINGLE_BUF_OK = bool(jnp.allclose(out, jnp.tile(px, (2, 1))))
        except Exception:
            _SINGLE_BUF_OK = False
    return _SINGLE_BUF_OK


def _zeros_imap(nd):
    def imap(b, j):
        return (0,) * nd
    return imap


# ---------------------------------------------------------------------------
# Kernel
# ---------------------------------------------------------------------------
def _mish(x, *, approx_recip):
    # mish(x) = x * tanh(softplus(x));  tanh(log(1+e)) == ((1+e)^2 - 1) / ((1+e)^2 + 1)
    # -> 1 exp + 1 (approx, EUP) reciprocal instead of exp + log1p + tanh.
    e = jnp.exp(jnp.minimum(x, 30.0))
    n = (1.0 + e) * (1.0 + e)
    if approx_recip:
        return x * (n - 1.0) * pl.reciprocal(n + 1.0, approx=True)
    return x * (n - 1.0) / (n + 1.0)


def _ffn_kernel(*refs, tT, T, K1, K2, H1, H2, fuse1, mm_dtype, has_halo):
    """One (batch, time-tile) per grid step.  Channel dims are 128-padded.

    x_ref:    (1, tT, Ci)        this tile's rows (also the residual)
    halo_ref: (1, 1, 2H, Ci)     H rows left + right of the tile (only present if H > 0)
    w1_ref:   (K1, Ci, Ch)  or (1, K1*Ci, Ch) when fuse1   [matmul dtype]
    b1_ref:   (1, Ch)  f32
    w2_ref:   (K2, Ch, Ci)                                  [matmul dtype]
    b2_ref:   (1, Ci)  f32
    o_ref:    (1, tT, Ci)
    """
    if has_halo:
        x_ref, halo_ref, w1_ref, b1_ref, w2_ref, b2_ref, o_ref = refs
    else:
        x_ref, w1_ref, b1_ref, w2_ref, b2_ref, o_ref = refs
        halo_ref = None

    H = H1 + H2
    L1 = tT + 2 * H2                      # hidden rows conv2 needs for this tile
    approx = (mm_dtype != jnp.float32)

    xt = x_ref[0]                         # (tT, Ci)
    if H > 0:
        halo = halo_ref[0, 0]             # (2H, Ci)
        xfull = jnp.concatenate([halo[:H, :], xt, halo[H:, :]], axis=0)
    else:
        xfull = xt
    xmm = xfull.astype(mm_dtype)          # (tT + 2H, Ci)

    # ---- conv1 over the extended row range [-H2, tT + H2) ----
    if fuse1:
        xcat = jnp.concatenate([xmm[k:k + L1, :] for k in range(K1)], axis=1)
        acc1 = jnp.dot(xcat, w1_ref[0], preferred_element_type=jnp.float32)
    else:
        acc1 = jnp.dot(xmm[0:L1, :], w1_ref[0], preferred_element_type=jnp.float32)
        for k in range(1, K1):
            acc1 = acc1 + jnp.dot(xmm[k:k + L1, :], w1_ref[k],
                                  preferred_element_type=jnp.float32)
    h = _mish(acc1 + b1_ref[...], approx_recip=approx)      # (L1, Ch) f32

    if H2 > 0:
        # rows outside the real [0, T) range are conv2's zero padding, not Mish(b1)
        g = pl.program_id(1) * tT - H2 + lax.broadcasted_iota(jnp.int32, (L1, 1), 0)
        h = jnp.where(jnp.logical_and(g >= 0, g < T), h, 0.0)

    hmm = h.astype(mm_dtype)

    # ---- conv2 (feeds straight from h; no scratch staging) ----
    acc2 = jnp.dot(hmm[0:tT, :], w2_ref[0], preferred_element_type=jnp.float32)
    for k in range(1, K2):
        acc2 = acc2 + jnp.dot(hmm[k:k + tT, :], w2_ref[k],
                              preferred_element_type=jnp.float32)

    # dropout == identity (eval mode); residual add in f32
    o_ref[0] = (acc2 + b2_ref[...] + xt.astype(jnp.float32)).astype(o_ref.dtype)


# ---------------------------------------------------------------------------
# Wrapper
# ---------------------------------------------------------------------------
def positionwise_ffn(x, w1, b1, w2, b2, kernel_sizes, *, time_tile=None,
                     matmul_dtype=jnp.bfloat16):
    """x: (B, T, d_in).  w1: (d_hid, d_in, K1), w2: (d_in, d_hid, K2)  (torch OIH layout)."""
    B, T, d_in = x.shape
    d_hid = w1.shape[0]
    K1, K2 = kernel_sizes
    if K1 % 2 == 0 or K2 % 2 == 0:
        raise ValueError("only odd ('same'-padded) kernel sizes are supported")
    H1, H2 = (K1 - 1) // 2, (K2 - 1) // 2
    H = H1 + H2

    # ---- lane-dense channel padding (exact: zero weights / bias / residual channels) --
    Ci = _round_up(d_in, 128)
    Ch = _round_up(d_hid, 128)
    itm = jnp.dtype(matmul_dtype).itemsize
    f32b = 4

    # fuse conv1 taps into one fat contraction only when it stays lane-aligned and
    # modest (128 per tap already saturates v5e's MXU; 256-512 suits v6e/v7x).
    fuse1 = (K1 > 1) and (Ci == 128) and (K1 * Ci <= 512)

    # ---- generation-aware VMEM budget and time tile --------------------------------
    vmem_cap = _vmem_capacity_bytes()
    budget = int(0.7 * vmem_cap)                       # leave headroom vs physical VMEM
    if time_tile is None:
        time_tile = 512 if vmem_cap >= 96 * 1024 * 1024 else 256   # v5e/v6e vs v7x

    const_bufs = 1 if _single_buffer_supported() else 2

    def est_bytes(t):
        L1 = t + 2 * H2
        return (4 * t * Ci * f32b                              # x + out blocks (2 bufs each)
                + (4 * H * Ci * f32b if H > 0 else 0)          # halo blocks
                + const_bufs * ((K1 * Ci * Ch + K2 * Ch * Ci) * itm
                                + (Ch + Ci) * f32b)            # weights + biases
                + (t + 2 * H) * Ci * (f32b + itm)              # xfull + matmul-dtype cast
                + (L1 * K1 * Ci * itm if fuse1 else 0)         # fused-tap staging
                + 3 * L1 * Ch * f32b + L1 * Ch * itm           # acc1 / Mish temps + cast
                + 2 * t * Ci * f32b)                           # acc2 + residual

    tT = max(8, (int(time_tile) // 8) * 8)
    tT = min(tT, _round_up(T, 8))
    while est_bytes(tT) > int(0.8 * budget) and tT > 8:        # headroom for scratch/DMA
        tT = max(8, ((tT // 2) + 7) // 8 * 8)

    nT = (T + tT - 1) // tT
    if B * nT < 2 and T > 8:                                   # keep both v7x cores busy
        tT = max(8, _round_up((T + 1) // 2, 8))
        nT = (T + tT - 1) // tT
    Tp = nT * tT

    vmem_limit = int(min(budget, max(32 * 1024 * 1024, 2 * est_bytes(tT))))

    # ---- pad input (time tail + channels); a no-op when already aligned ------------
    if Tp != T or Ci != d_in:
        xp = jnp.pad(x, ((0, 0), (0, Tp - T), (0, Ci - d_in)))
    else:
        xp = x

    # ---- per-tile halos: H rows left + right of every tile, one pad + gather -------
    if H > 0:
        xh = jnp.pad(xp, ((0, 0), (H, H), (0, 0)))             # (B, Tp + 2H, Ci)
        idx = (np.arange(nT)[:, None] * tT
               + np.concatenate([np.arange(H), np.arange(tT + H, tT + 2 * H)])[None, :])
        halos = jnp.take(xh, jnp.asarray(idx.reshape(-1), jnp.int32), axis=1)
        halos = halos.reshape(B, nT, 2 * H, Ci)
    else:
        halos = None

    # ---- weights: tap-major, channels-last, matmul dtype, zero-padded to 128 lanes --
    w1_k = jnp.pad(jnp.transpose(w1, (2, 1, 0)),
                   ((0, 0), (0, Ci - d_in), (0, Ch - d_hid))).astype(matmul_dtype)
    w2_k = jnp.pad(jnp.transpose(w2, (2, 1, 0)),
                   ((0, 0), (0, Ch - d_hid), (0, Ci - d_in))).astype(matmul_dtype)
    if fuse1:
        w1_k = w1_k.reshape(1, K1 * Ci, Ch)                    # one fat contraction
    b1_r = jnp.pad(b1.astype(jnp.float32), (0, Ch - d_hid)).reshape(1, Ch)
    b2_r = jnp.pad(b2.astype(jnp.float32), (0, Ci - d_in)).reshape(1, Ci)

    # ---- specs ----------------------------------------------------------------------
    pm = pl.Buffered(1) if const_bufs == 1 else None

    def const_spec(shape):
        imap = _zeros_imap(len(shape))
        if pm is not None:
            return pl.BlockSpec(shape, imap, pipeline_mode=pm)
        return pl.BlockSpec(shape, imap)

    in_specs = [pl.BlockSpec((1, tT, Ci), lambda b, j: (b, j, 0))]
    operands = [xp]
    if H > 0:
        in_specs.append(pl.BlockSpec((1, 1, 2 * H, Ci), lambda b, j: (b, j, 0, 0)))
        operands.append(halos)
    in_specs += [const_spec(w1_k.shape), const_spec(b1_r.shape),
                 const_spec(w2_k.shape), const_spec(b2_r.shape)]
    operands += [w1_k, b1_r, w2_k, b2_r]

    kernel = functools.partial(
        _ffn_kernel, tT=tT, T=T, K1=K1, K2=K2, H1=H1, H2=H2,
        fuse1=fuse1, mm_dtype=matmul_dtype, has_halo=(H > 0))

    out = pl.pallas_call(
        kernel,
        out_shape=jax.ShapeDtypeStruct((B, Tp, Ci), x.dtype),
        grid_spec=pltpu.PrefetchScalarGridSpec(
            num_scalar_prefetch=0,
            grid=(B, nT),
            in_specs=in_specs,
            out_specs=pl.BlockSpec((1, tT, Ci), lambda b, j: (b, j, 0)),
        ),
        compiler_params=pltpu.CompilerParams(
            dimension_semantics=("parallel", "parallel"),
            vmem_limit_bytes=vmem_limit),
    )(*operands)

    if Tp != T or Ci != d_in:
        out = out[:, :T, :d_in]
    return out


# ---------------------------------------------------------------------------
# Reference + tests
# ---------------------------------------------------------------------------
def _reference(x, w1, b1, w2, b2, kernel_sizes):
    """Pure-JAX mirror of the PyTorch forward (eval mode: dropout = identity)."""
    K1, K2 = kernel_sizes
    p1, p2 = (K1 - 1) // 2, (K2 - 1) // 2
    xt = jnp.transpose(x, (0, 2, 1))                                    # (B, d_in, T)
    h = lax.conv_general_dilated(xt, w1, (1,), [(p1, p1)],
                                 dimension_numbers=("NCH", "OIH", "NCH"))
    h = h + b1[None, :, None]
    h = h * jnp.tanh(jnp.logaddexp(h, 0.0))                             # Mish
    o = lax.conv_general_dilated(h, w2, (1,), [(p2, p2)],
                                 dimension_numbers=("NCH", "OIH", "NCH"))
    o = o + b2[None, :, None]
    return jnp.transpose(o, (0, 2, 1)) + x


def _make_params(key, d_in, d_hid, K1, K2):
    k_w1, k_b1, k_w2, k_b2 = jax.random.split(key, 4)
    lim1 = (6.0 / ((d_in + d_hid) * K1)) ** 0.5
    w1 = jax.random.uniform(k_w1, (d_hid, d_in, K1), jnp.float32, -lim1, lim1)
    b1 = jax.random.uniform(k_b1, (d_hid,), jnp.float32, -0.1, 0.1)
    lim2 = (6.0 / ((d_hid + d_in) * K2)) ** 0.5
    w2 = jax.random.uniform(k_w2, (d_in, d_hid, K2), jnp.float32, -lim2, lim2)
    b2 = jax.random.uniform(k_b2, (d_in,), jnp.float32, -0.1, 0.1)
    return w1, b1, w2, b2


if __name__ == "__main__":
    key = jax.random.PRNGKey(0)
    k_x, k_p, k_x2, k_x3 = jax.random.split(key, 4)

    # config A/B: single time tile, fft_conv1d_kernel_size = (3, 1)
    B, T, d_in, d_hid = 2, 16, 16, 32
    ks = (3, 1)
    x = jax.random.normal(k_x, (B, T, d_in), jnp.float32)
    w1, b1, w2, b2 = _make_params(k_p, d_in, d_hid, *ks)
    ref = _reference(x, w1, b1, w2, b2, ks)

    # A: f32 matmuls (exact logic / channel-padding check)
    out = jax.block_until_ready(
        positionwise_ffn(x, w1, b1, w2, b2, ks, matmul_dtype=jnp.float32))
    assert out.shape == (B, T, d_in)
    assert jnp.allclose(out, ref, atol=1e-4, rtol=1e-4), "f32 path mismatch vs reference"

    # B: bf16 MXU fast path (f32 accumulation / bias / Mish / residual)
    out_bf = jax.block_until_ready(positionwise_ffn(x, w1, b1, w2, b2, ks))
    assert jnp.allclose(out_bf, ref, atol=5e-2, rtol=5e-2), "bf16 path mismatch vs reference"

    # C: time-tiled grid (nT = 4) with K2 > 1 (halo + hidden-boundary mask path)
    B2, T2, ks2 = 2, 32, (3, 3)
    x2 = jax.random.normal(k_x2, (B2, T2, d_in), jnp.float32)
    w1c, b1c, w2c, b2c = _make_params(jax.random.fold_in(key, 7), d_in, d_hid, *ks2)
    ref2 = _reference(x2, w1c, b1c, w2c, b2c, ks2)
    out2 = jax.block_until_ready(
        positionwise_ffn(x2, w1c, b1c, w2c, b2c, ks2, time_tile=8))
    assert jnp.allclose(out2, ref2, atol=5e-2, rtol=5e-2), "tiled bf16 path mismatch"

    # D: ragged T (19 rows, 8-row tiles), unfused conv1 (K1=9), exact f32 check
    B3, T3, ks3 = 1, 19, (9, 3)
    x3 = jax.random.normal(k_x3, (B3, T3, d_in), jnp.float32)
    w1d, b1d, w2d, b2d = _make_params(jax.random.fold_in(key, 11), d_in, d_hid, *ks3)
    ref3 = _reference(x3, w1d, b1d, w2d, b2d, ks3)
    out3 = jax.block_until_ready(
        positionwise_ffn(x3, w1d, b1d, w2d, b2d, ks3, time_tile=8,
                         matmul_dtype=jnp.float32))
    assert jnp.allclose(out3, ref3, atol=1e-4, rtol=1e-4), "ragged-T f32 path mismatch"

    print("KERNEL_OK")
</pallas_src>

<mosaic_0001>
module attributes {stable_mosaic.version = 11 : i64} {
  func.func @_probe_copy_kernel(%arg0: i32, %arg1: memref<8x128xf32, #tpu.memory_space<vmem>>, %arg2: memref<8x128xf32, #tpu.memory_space<vmem>>) attributes {dimension_semantics = [#tpu.dimension_semantics<arbitrary>], iteration_bounds = array<i64: 2>, scalar_prefetch = 0 : i64, scratch_operands = 0 : i64, tpu.core_type = #tpu.core_type<tc>, window_params = [{pipeline_mode = #tpu.pipeline_mode<synchronous>, transform_indices = @transform_0, window_bounds = array<i64: 8, 128>}, {transform_indices = @transform_1, window_bounds = array<i64: 8, 128>}]} {
    %c0 = arith.constant 0 : index
    %c0_0 = arith.constant 0 : index
    %0 = vector.load %arg1[%c0, %c0_0] : memref<8x128xf32, #tpu.memory_space<vmem>>, vector<8x128xf32>
    %c0_1 = arith.constant 0 : index
    %c0_2 = arith.constant 0 : index
    %1 = vector.load %arg2[%c0_1, %c0_2] : memref<8x128xf32, #tpu.memory_space<vmem>>, vector<8x128xf32>
    tpu.vector_store %arg2[%c0_1, %c0_2], %0 {strides = array<i32>} : memref<8x128xf32, #tpu.memory_space<vmem>>, vector<8x128xf32>,
    return
  }
  func.func @transform_0(%arg0: i32) -> (i32, i32) {
    %c0_i32 = arith.constant 0 : i32
    %c0_i32_0 = arith.constant 0 : i32
    %c0_i32_1 = arith.constant 0 : i32
    return %c0_i32, %c0_i32_0 : i32, i32
  }
  func.func @transform_1(%arg0: i32) -> (i32, i32) {
    %c0_i32 = arith.constant 0 : i32
    %c0_i32_0 = arith.constant 0 : i32
    return %arg0, %c0_i32 : i32, i32
  }
}

module attributes {stable_mosaic.version = 11 : i64} {
  func.func @_ffn_kernel(%arg0: i32, %arg1: i32, %arg2: memref<1x16x128xf32, #tpu.memory_space<vmem>>, %arg3: memref<1x1x2x128xf32, #tpu.memory_space<vmem>>, %arg4: memref<1x384x128xf32, #tpu.memory_space<vmem>>, %arg5: memref<1x128xf32, #tpu.memory_space<vmem>>, %arg6: memref<1x128x128xf32, #tpu.memory_space<vmem>>, %arg7: memref<1x128xf32, #tpu.memory_space<vmem>>, %arg8: memref<1x16x128xf32, #tpu.memory_space<vmem>>) attributes {dimension_semantics = [#tpu.dimension_semantics<parallel>, #tpu.dimension_semantics<parallel>], iteration_bounds = array<i64: 2, 1>, scalar_prefetch = 0 : i64, scratch_operands = 0 : i64, tpu.core_type = #tpu.core_type<tc>, window_params = [{transform_indices = @transform_0, window_bounds = array<i64: 1, 16, 128>}, {transform_indices = @transform_1, window_bounds = array<i64: 1, 1, 2, 128>}, {pipeline_mode = #tpu.pipeline_mode<synchronous>, transform_indices = @transform_2, window_bounds = array<i64: 1, 384, 128>}, {pipeline_mode = #tpu.pipeline_mode<synchronous>, transform_indices = @transform_3, window_bounds = array<i64: 1, 128>}, {pipeline_mode = #tpu.pipeline_mode<synchronous>, transform_indices = @transform_4, window_bounds = array<i64: 1, 128, 128>}, {pipeline_mode = #tpu.pipeline_mode<synchronous>, transform_indices = @transform_5, window_bounds = array<i64: 1, 128>}, {transform_indices = @transform_6, window_bounds = array<i64: 1, 16, 128>}]} {
    %c0 = arith.constant 0 : index
    %c0_0 = arith.constant 0 : index
    %c0_1 = arith.constant 0 : index
    %0 = vector.load %arg2[%c0, %c0_0, %c0_1] : memref<1x16x128xf32, #tpu.memory_space<vmem>>, vector<1x16x128xf32>
    %1 = vector.shape_cast %0 : vector<1x16x128xf32> to vector<16x128xf32>
    %c0_2 = arith.constant 0 : index
    %c0_3 = arith.constant 0 : index
    %c0_4 = arith.constant 0 : index
    %c0_5 = arith.constant 0 : index
    %2 = vector.load %arg3[%c0_2, %c0_3, %c0_4, %c0_5] : memref<1x1x2x128xf32, #tpu.memory_space<vmem>>, vector<1x1x2x128xf32>
    %3 = vector.shape_cast %2 : vector<1x1x2x128xf32> to vector<2x128xf32>
    %4 = vector.extract_strided_slice %3 {offsets = [0, 0], sizes = [1, 128], strides = [1, 1]} : vector<2x128xf32> to vector<1x128xf32>
    %5 = vector.extract_strided_slice %3 {offsets = [1, 0], sizes = [1, 128], strides = [1, 1]} : vector<2x128xf32> to vector<1x128xf32>
    %6 = tpu.concatenate %4, %1, %5 in 0 : vector<1x128xf32>, vector<16x128xf32>, vector<1x128xf32> -> vector<18x128xf32>
    %7 = vector.extract_strided_slice %6 {offsets = [0, 0], sizes = [16, 128], strides = [1, 1]} : vector<18x128xf32> to vector<16x128xf32>
    %8 = vector.extract_strided_slice %6 {offsets = [1, 0], sizes = [16, 128], strides = [1, 1]} : vector<18x128xf32> to vector<16x128xf32>
    %9 = vector.extract_strided_slice %6 {offsets = [2, 0], sizes = [16, 128], strides = [1, 1]} : vector<18x128xf32> to vector<16x128xf32>
    %10 = tpu.concatenate %7, %8, %9 in 1 : vector<16x128xf32>, vector<16x128xf32>, vector<16x128xf32> -> vector<16x384xf32>
    %c0_6 = arith.constant 0 : index
    %c0_7 = arith.constant 0 : index
    %c0_8 = arith.constant 0 : index
    %11 = vector.load %arg4[%c0_6, %c0_7, %c0_8] : memref<1x384x128xf32, #tpu.memory_space<vmem>>, vector<1x384x128xf32>
    %12 = vector.shape_cast %11 : vector<1x384x128xf32> to vector<384x128xf32>
    %cst = arith.constant dense<0.000000e+00> : vector<16x128xf32>
    %13 = tpu.matmul %10, %12, %cst {dimension_numbers = #tpu.dot_dimension_numbers<[1], [0], [0], [1], [0, 0, 1, 1], [], []>} : vector<16x384xf32>, vector<384x128xf32>, vector<16x128xf32> -> vector<16x128xf32>
    %c0_9 = arith.constant 0 : index
    %c0_10 = arith.constant 0 : index
    %14 = vector.load %arg5[%c0_9, %c0_10] : memref<1x128xf32, #tpu.memory_space<vmem>>, vector<1x128xf32>
    %15 = vector.broadcast %14 : vector<1x128xf32> to vector<16x128xf32>
    %16 = arith.addf %13, %15 : vector<16x128xf32>
    %cst_11 = arith.constant 3.000000e+01 : f32
    %17 = vector.broadcast %cst_11 : f32 to vector<16x128xf32>
    %18 = arith.minimumf %16, %17 : vector<16x128xf32>
    %19 = math.exp %18 : vector<16x128xf32>
    %cst_12 = arith.constant 1.000000e+00 : f32
    %20 = vector.broadcast %cst_12 : f32 to vector<16x128xf32>
    %21 = arith.addf %20, %19 : vector<16x128xf32>
    %cst_13 = arith.constant 1.000000e+00 : f32
    %22 = vector.broadcast %cst_13 : f32 to vector<16x128xf32>
    %23 = arith.addf %22, %19 : vector<16x128xf32>
    %24 = arith.mulf %21, %23 : vector<16x128xf32>
    %cst_14 = arith.constant 1.000000e+00 : f32
    %25 = vector.broadcast %cst_14 : f32 to vector<16x128xf32>
    %26 = arith.subf %24, %25 : vector<16x128xf32>
    %27 = arith.mulf %16, %26 : vector<16x128xf32>
    %cst_15 = arith.constant 1.000000e+00 : f32
    %28 = vector.broadcast %cst_15 : f32 to vector<16x128xf32>
    %29 = arith.addf %24, %28 : vector<16x128xf32>
    %30 = arith.divf %27, %29 : vector<16x128xf32>
    %c0_16 = arith.constant 0 : index
    %c0_17 = arith.constant 0 : index
    %c0_18 = arith.constant 0 : index
    %31 = vector.load %arg6[%c0_16, %c0_17, %c0_18] : memref<1x128x128xf32, #tpu.memory_space<vmem>>, vector<1x128x128xf32>
    %32 = vector.shape_cast %31 : vector<1x128x128xf32> to vector<128x128xf32>
    %cst_19 = arith.constant dense<0.000000e+00> : vector<16x128xf32>
    %33 = tpu.matmul %30, %32, %cst_19 {dimension_numbers = #tpu.dot_dimension_numbers<[1], [0], [0], [1], [0, 0, 1, 1], [], []>} : vector<16x128xf32>, vector<128x128xf32>, vector<16x128xf32> -> vector<16x128xf32>
    %c0_20 = arith.constant 0 : index
    %c0_21 = arith.constant 0 : index
    %34 = vector.load %arg7[%c0_20, %c0_21] : memref<1x128xf32, #tpu.memory_space<vmem>>, vector<1x128xf32>
    %35 = vector.broadcast %34 : vector<1x128xf32> to vector<16x128xf32>
    %36 = arith.addf %33, %35 : vector<16x128xf32>
    %37 = arith.addf %36, %1 : vector<16x128xf32>
    %c0_22 = arith.constant 0 : index
    %c0_23 = arith.constant 0 : index
    %c0_24 = arith.constant 0 : index
    %38 = vector.load %arg8[%c0_22, %c0_23, %c0_24] : memref<1x16x128xf32, #tpu.memory_space<vmem>>, vector<1x16x128xf32>
    %39 = vector.shape_cast %38 : vector<1x16x128xf32> to vector<16x128xf32>
    %40 = vector.shape_cast %37 : vector<16x128xf32> to vector<1x16x128xf32>
    tpu.vector_store %arg8[%c0_22, %c0_23, %c0_24], %40 {strides = array<i32>} : memref<1x16x128xf32, #tpu.memory_space<vmem>>, vector<1x16x128xf32>,
    return
  }
  func.func @transform_0(%arg0: i32, %arg1: i32) -> (i32, i32, i32) {
    %c0_i32 = arith.constant 0 : i32
    %c0_i32_0 = arith.constant 0 : i32
    return %arg0, %arg1, %c0_i32 : i32, i32, i32
  }
  func.func @transform_1(%arg0: i32, %arg1: i32) -> (i32, i32, i32, i32) {
    %c0_i32 = arith.constant 0 : i32
    %c0_i32_0 = arith.constant 0 : i32
    %c0_i32_1 = arith.constant 0 : i32
    return %arg0, %arg1, %c0_i32, %c0_i32_0 : i32, i32, i32, i32
  }
  func.func @transform_2(%arg0: i32, %arg1: i32) -> (i32, i32, i32) {
    %c0_i32 = arith.constant 0 : i32
    %c0_i32_0 = arith.constant 0 : i32
    %c0_i32_1 = arith.constant 0 : i32
    %c0_i32_2 = arith.constant 0 : i32
    return %c0_i32, %c0_i32_0, %c0_i32_1 : i32, i32, i32
  }
  func.func @transform_3(%arg0: i32, %arg1: i32) -> (i32, i32) {
    %c0_i32 = arith.constant 0 : i32
    %c0_i32_0 = arith.constant 0 : i32
    %c0_i32_1 = arith.constant 0 : i32
    return %c0_i32, %c0_i32_0 : i32, i32
  }
  func.func @transform_4(%arg0: i32, %arg1: i32) -> (i32, i32, i32) {
    %c0_i32 = arith.constant 0 : i32
    %c0_i32_0 = arith.constant 0 : i32
    %c0_i32_1 = arith.constant 0 : i32
    %c0_i32_2 = arith.constant 0 : i32
    return %c0_i32, %c0_i32_0, %c0_i32_1 : i32, i32, i32
  }
  func.func @transform_5(%arg0: i32, %arg1: i32) -> (i32, i32) {
    %c0_i32 = arith.constant 0 : i32
    %c0_i32_0 = arith.constant 0 : i32
    %c0_i32_1 = arith.constant 0 : i32
    return %c0_i32, %c0_i32_0 : i32, i32
  }
  func.func @transform_6(%arg0: i32, %arg1: i32) -> (i32, i32, i32) {
    %c0_i32 = arith.constant 0 : i32
    %c0_i32_0 = arith.constant 0 : i32
    return %arg0, %arg1, %c0_i32 : i32, i32, i32
  }
}

</mosaic_0001>

<llo_original>
// kernel: tpu_custom_call.1
$region0: #{tpu_custom_call.1}
  #allocation0 [shape = 'u32[]', space=smem, size = 0x4, offset = 0x4, fixed_abs, tag = 'smem constant byte address 0x4 - core index']
  #allocation1 [shape = 'u32[144,128]{1,0:T(1,128)}', space=vmem, size = 0x12000, scoped, tag = 'internal scratch']
  %s0 = inlined_call_operand.hbm [shape: f32[8,128], index: 0, kind: input, shape index: {}]
  %s1 = inlined_call_operand.hbm [shape: f32[16,128], index: 1, kind: output, shape index: {}]
  %s2 = sld [smem:[#allocation0]]
  $region41: #{tpu_custom_call.1} parent=0
    _
  %s4 = ssub.s32 1, %s2
  %s5 = scalar_select 0, %s4, %s2
  $region1: #{tpu_custom_call.1} parent=0
    #allocation2 [shape = 'u8[4096]{0}', space=vmem, size = 0x1000, scoped, tag = 'input window, operand 0, single buffered']
    #allocation3 [shape = 's32[2]{0}', space=sflag, size = 0x8, scoped, tag = 'scoped memory for tpu_custom_call.1']
    #allocation4 [shape = 's32[2]{0}', space=sflag, size = 0x8, scoped, tag = 'scoped memory for tpu_custom_call.1']
    #allocation5 [shape = 'u8[8192]{0}', space=vmem, size = 0x2000, scoped, tag = 'output window, operand 0']
    %6 = vsyncpa [#allocation3], 0
    %7 = vsyncpa [#allocation4], 0
    %s8 = scalar_lea.sflag [#allocation4], 1
    %9 = vsyncpa %s8, 0
    loop: start=0, step=1, limit=4
    $region2: #{tpu_custom_call.1} parent=1 // loop_pre_header
      _
    $region3: #{tpu_custom_call.1} parent=1 // loop_header
      %s11 = sphi 0, %s15
      %p12 = scmp.ge.s32.totalorder %s11, 4
      %s19 = sphi 0, %s19
      %s21 = sphi 0, %s19
      %s22 = sphi 0, %s21
      %s36 = sphi 0, %s22
      %s42 = sphi 0, %s44
      %s45 = sphi 0, %s42
      %s46 = sphi 0, %s45
      %s62 = sphi 0, %s46
    $region4: #{tpu_custom_call.1} parent=1 // loop_header_branch
      %14 = sbr.rel (%p12) target = $region8
    $region5: #{tpu_custom_call.1} parent=1 // loop_body
      %s16 = ssub.s32 %s11, 1
      %s17 = ssub.s32 %s11, 2
      %s18 = sadd.s32 %s11, 1
      %s20 = sadd.s32 %s19, 1
      %p23 = scmp.eq.s32.totalorder %s11, 1
      %p24 = scmp.ne.s32.totalorder %s19, %s21
      %p25 = scmp.eq.s32.totalorder %s11, 0
      %p26 = por %p24, %p25
      %p27 = scmp.ne.s32.totalorder %s19, %s21
      %p28 = scmp.eq.s32.totalorder %s16, 1
      %p29 = por %p27, %p28
      %p30 = scmp.ne.s32.totalorder %s21, %s22
      %p31 = scmp.eq.s32.totalorder %s16, 0
      %p32 = por %p30, %p31
      %p33 = scmp.ne.s32.totalorder %s21, %s22
      %p34 = scmp.eq.s32.totalorder %s17, 1
      %p35 = por %p33, %p34
      %p37 = scmp.ne.s32.totalorder %s22, %s36
      %p38 = scmp.eq.s32.totalorder %s17, 0
      %p39 = por %p37, %p38
      %s40 = ssub.s32 %s11, %s18
      %p41 = scmp.eq.s32.totalorder %s40, 0
      %s43 = sadd.s32 %s42, 1
      %s44 = scalar_select %p41, %s42, %s43
      %p47 = pneg %p41
      %p48 = scmp.eq.s32.totalorder %s11, 1
      %p49 = por %p47, %p48
      %p50 = scmp.ne.s32.totalorder %s42, %s45
      %p51 = scmp.eq.s32.totalorder %s11, 0
      %p52 = por %p50, %p51
      %p53 = scmp.ne.s32.totalorder %s42, %s45
      %p54 = scmp.eq.s32.totalorder %s16, 1
      %p55 = por %p53, %p54
      %p56 = scmp.ne.s32.totalorder %s45, %s46
      %p57 = scmp.eq.s32.totalorder %s16, 0
      %p58 = por %p56, %p57
      %p59 = scmp.ne.s32.totalorder %s45, %s46
      %p60 = scmp.eq.s32.totalorder %s17, 1
      %p61 = por %p59, %p60
      %p63 = scmp.ne.s32.totalorder %s46, %s62
      %p64 = scmp.eq.s32.totalorder %s17, 0
      %p65 = por %p63, %p64
      %p66 = scmp.le.s32.totalorder 1, %s11
      %p67 = scmp.lt.s32.totalorder %s11, 3
      %p68 = pnand %p66, %p67
      %p69 = pneg %p68
      // Predicated region
      $region9: #{tpu_custom_call.1} parent=5 // pred_check
        _
      $region10: #{tpu_custom_call.1} parent=5 // pred_check_branch
        %71 = sbr.rel (%p68) target = $region12
      $region11: #{tpu_custom_call.1} parent=5 // pred_region
        %s72 = ssub.s32 %s11, 1
        // Predicated region
        $region13: #{tpu_custom_call.1} parent=11 // pred_check
          %p73 = pneg %p32
        $region14: #{tpu_custom_call.1} parent=11 // pred_check_branch
          %75 = sbr.rel (%p73) target = $region16
        $region15: #{tpu_custom_call.1} parent=11 // pred_region
          %s77 = ssub.s32 128, 128
          %78 = vsyncadd [#allocation3], %s77
          %s80 = sshll.u32 [#allocation2], 4
          %s81 = int_to_ptr.vmem [resolvable:$true] %s80
          %83 = dma.hbm_to_vmem [thread:$0]  %s0, 128, %s81, [#allocation3]
        $region16: #{tpu_custom_call.1} parent=11 // pred_fallthru
          _
      $region12: #{tpu_custom_call.1} parent=5 // pred_fallthru
        _
      %p84 = scmp.lt.s32.totalorder %s11, 2
      // Predicated region
      $region17: #{tpu_custom_call.1} parent=5 // pred_check
        %p85 = pneg %p84
      $region18: #{tpu_custom_call.1} parent=5 // pred_check_branch
        %87 = sbr.rel (%p85) target = $region20
      $region19: #{tpu_custom_call.1} parent=5 // pred_region
        _
      $region20: #{tpu_custom_call.1} parent=5 // pred_fallthru
        _
      %p88 = scmp.le.s32.totalorder 1, %s11
      %p89 = scmp.lt.s32.totalorder %s11, 3
      %p90 = pnand %p88, %p89
      %p91 = pneg %p90
      // Predicated region
      $region21: #{tpu_custom_call.1} parent=5 // pred_check
        _
      $region22: #{tpu_custom_call.1} parent=5 // pred_check_branch
        %93 = sbr.rel (%p90) target = $region24
      $region23: #{tpu_custom_call.1} parent=5 // pred_region
        %s94 = ssub.s32 %s11, 1
        // Predicated region
        $region25: #{tpu_custom_call.1} parent=23 // pred_check
          %p95 = pneg %p32
        $region26: #{tpu_custom_call.1} parent=23 // pred_check_branch
          %97 = sbr.rel (%p95) target = $region28
        $region27: #{tpu_custom_call.1} parent=23 // pred_region
          %98 = dma.done [#allocation3], 128
        $region28: #{tpu_custom_call.1} parent=23 // pred_fallthru
          _
        %p99 = pneg %p32
        %p100 = pneg %p29
        %p101 = pneg %p58
        %p102 = pneg %p55
        %s103 = sand.u32 %s45, 1
        %s104 = scalar_lea.sflag [#allocation4], %s103
        %s105 = sand.u32 %s45, 1
        %s106 = smul.addr %s105, 8
        %s107 = scalar_lea.vmem [#allocation5], %s106
        %v108 = vld [vmem:[#allocation2] sm:$0xff]
        %109 = vst [vmem:[%s107] sm:$0xff] %v108
        %s110 = sand.u32 %s45, 1
        %s111 = scalar_lea.sflag [#allocation4], %s110
        %s112 = sand.u32 %s45, 1
        %s113 = smul.addr %s112, 8
        %s114 = scalar_lea.vmem [#allocation5], %s113
        // Predicated region
        $region29: #{tpu_custom_call.1} parent=23 // pred_check
          %p115 = pneg %p55
        $region30: #{tpu_custom_call.1} parent=23 // pred_check_branch
          %117 = sbr.rel (%p115) target = $region32
        $region31: #{tpu_custom_call.1} parent=23 // pred_region
          %s119 = ssub.s32 128, 128
          %120 = vsyncadd %s111, %s119
          %s121 = smul.addr %s16, 128
          %s122 = scalar_lea.hbm %s1, %s121
          %s124 = sshll.u32 %s114, 4
          %s125 = int_to_ptr.vmem [resolvable:$true] %s124
          %127 = dma.vmem_to_hbm [thread:$0]  %s125, 128, %s122, %s111
        $region32: #{tpu_custom_call.1} parent=23 // pred_fallthru
          _
      $region24: #{tpu_custom_call.1} parent=5 // pred_fallthru
        _
      %p128 = scmp.le.s32.totalorder 2, %s11
      // Predicated region
      $region33: #{tpu_custom_call.1} parent=5 // pred_check
        %p129 = pneg %p128
      $region34: #{tpu_custom_call.1} parent=5 // pred_check_branch
        %131 = sbr.rel (%p129) target = $region36
      $region35: #{tpu_custom_call.1} parent=5 // pred_region
        %s132 = ssub.s32 %s11, 2
        // Predicated region
        $region37: #{tpu_custom_call.1} parent=35 // pred_check
          %p133 = pneg %p61
        $region38: #{tpu_custom_call.1} parent=35 // pred_check_branch
          %135 = sbr.rel (%p133) target = $region40
        $region39: #{tpu_custom_call.1} parent=35 // pred_region
          %s136 = sand.u32 %s46, 1
          %s137 = scalar_lea.sflag [#allocation4], %s136
          %s138 = sand.u32 %s46, 1
          %s139 = smul.addr %s138, 8
          %s140 = scalar_lea.vmem [#allocation5], %s139
          %141 = dma.done %s137, 128
        $region40: #{tpu_custom_call.1} parent=35 // pred_fallthru
          _
      $region36: #{tpu_custom_call.1} parent=5 // pred_fallthru
        _
    $region6: #{tpu_custom_call.1} parent=1 // loop_footer
      %s15 = sadd.s32 1, %s11
    $region7: #{tpu_custom_call.1} parent=1 // loop_footer_branch
      %10 = sbr.rel target = $region3
    $region8: #{tpu_custom_call.1} parent=1 // loop_exit
      _
    %142 = vsyncpa [#allocation3], 1
    %s143 = scalar_lea.sflag [#allocation3], 1
    %144 = vsyncpa %s143, 1
    %145 = vsyncpa [#allocation4], 1
    %s146 = scalar_lea.sflag [#allocation4], 1
    %147 = vsyncpa %s146, 1

// kernel: tpu_custom_call.1
$region0: #{tpu_custom_call.1}
  #allocation0 [shape = 'u32[]', space=smem, size = 0x4, offset = 0x4, fixed_abs, tag = 'smem constant byte address 0x4 - core index']
  #allocation1 [shape = 'u32[144,128]{1,0:T(1,128)}', space=vmem, size = 0x12000, scoped, tag = 'internal scratch']
  %s0 = inlined_call_operand.hbm [shape: f32[2,16,128], index: 0, kind: input, shape index: {}]
  %s1 = inlined_call_operand.hbm [shape: f32[2,1,2,128], index: 1, kind: input, shape index: {}]
  %s2 = inlined_call_operand.hbm [shape: f32[1,384,128], index: 2, kind: input, shape index: {}]
  %s3 = inlined_call_operand.vmem [shape: f32[1,128], index: 3, kind: input, shape index: {}]
  %s4 = inlined_call_operand.hbm [shape: f32[1,128,128], index: 4, kind: input, shape index: {}]
  %s5 = inlined_call_operand.vmem [shape: f32[1,128], index: 5, kind: input, shape index: {}]
  %s6 = inlined_call_operand.hbm [shape: f32[2,16,128], index: 6, kind: output, shape index: {}]
  %s7 = sld [smem:[#allocation0]]
  $region73: #{tpu_custom_call.1} parent=0
    _
  %s9 = ssub.s32 1, %s7
  %s10 = scalar_select 0, %s9, %s7
  $region1: #{tpu_custom_call.1} parent=0
    #allocation2 [shape = 'u8[16384]{0}', space=vmem, size = 0x4000, scoped, tag = 'input window, operand 0']
    #allocation3 [shape = 's32[2]{0}', space=sflag, size = 0x8, scoped, tag = 'scoped memory for tpu_custom_call.1']
    #allocation4 [shape = 's32[2]{0}', space=sflag, size = 0x8, scoped, tag = 'scoped memory for tpu_custom_call.1']
    #allocation5 [shape = 'u8[2048]{0}', space=vmem, size = 0x800, scoped, tag = 'input window, operand 1']
    #allocation6 [shape = 's32[2]{0}', space=sflag, size = 0x8, scoped, tag = 'scoped memory for tpu_custom_call.1']
    #allocation7 [shape = 'u8[196608]{0}', space=vmem, size = 0x30000, scoped, tag = 'input window, operand 2, single buffered']
    #allocation8 [shape = 'u8[65536]{0}', space=vmem, size = 0x10000, scoped, tag = 'input window, operand 4, single buffered']
    #allocation9 [shape = 's32[1]{0}', space=sflag, size = 0x4, scoped, tag = 'scoped memory for tpu_custom_call.1']
    #allocation10 [shape = 'u8[16384]{0}', space=vmem, size = 0x4000, scoped, tag = 'output window, operand 0']
    %11 = vsyncpa [#allocation3], 0
    %s12 = scalar_lea.sflag [#allocation3], 1
    %13 = vsyncpa %s12, 0
    %14 = vsyncpa [#allocation6], 0
    %s15 = scalar_lea.sflag [#allocation6], 1
    %16 = vsyncpa %s15, 0
    %17 = vsyncpa [#allocation9], 0
    %18 = vsyncpa [#allocation4], 0
    %s19 = scalar_lea.sflag [#allocation4], 1
    %20 = vsyncpa %s19, 0
    loop: start=0, step=1, limit=4
    $region2: #{tpu_custom_call.1} parent=1 // loop_pre_header
      _
    $region3: #{tpu_custom_call.1} parent=1 // loop_header
      %s22 = sphi 0, %s26
      %p23 = scmp.ge.s32.totalorder %s22, 4
      %s29 = sphi 0, %s41
      %s30 = sphi 0, %s37
      %s31 = sphi 0, %s29
      %s32 = sphi 0, %s30
      %s33 = sphi 0, %s31
      %s34 = sphi 0, %s32
      %s46 = sphi 0, %s48
      %s49 = sphi 0, %s46
      %s50 = sphi 0, %s49
      %s66 = sphi 0, %s50
      %s74 = sphi 0, %s76
      %s77 = sphi 0, %s74
      %s78 = sphi 0, %s77
      %s94 = sphi 0, %s78
      %s98 = sphi 0, %s98
      %s100 = sphi 0, %s98
      %s101 = sphi 0, %s100
      %s115 = sphi 0, %s101
      %s119 = sphi 0, %s119
      %s121 = sphi 0, %s119
      %s122 = sphi 0, %s121
      %s136 = sphi 0, %s122
      %s140 = sphi 0, %s140
      %s142 = sphi 0, %s140
      %s143 = sphi 0, %s142
      %s157 = sphi 0, %s143
      %s161 = sphi 0, %s161
      %s163 = sphi 0, %s161
      %s164 = sphi 0, %s163
      %s178 = sphi 0, %s164
      %s186 = sphi 0, %s188
      %s189 = sphi 0, %s186
      %s190 = sphi 0, %s189
      %s206 = sphi 0, %s190
    $region4: #{tpu_custom_call.1} parent=1 // loop_header_branch
      %25 = sbr.rel (%p23) target = $region8
    $region5: #{tpu_custom_call.1} parent=1 // loop_body
      %s27 = ssub.s32 %s22, 1
      %s28 = ssub.s32 %s22, 2
      %s35 = sadd.s32 1, %s30
      %p36 = scmp.ge.s32.totalorder %s35, 1
      %s37 = scalar_select %p36, 0, %s35
      %s38 = sadd.s32 1, %s29
      %s39 = scalar_select %p36, %s38, %s29
      %p40 = scmp.ge.s32.totalorder %s39, 2
      %s41 = scalar_select %p40, 0, %s39
      %s42 = ssub.s32 %s29, %s41
      %s43 = ssub.s32 %s30, %s37
      %s44 = sor.u32 %s42, %s43
      %p45 = scmp.eq.s32.totalorder %s44, 0
      %s47 = sadd.s32 %s46, 1
      %s48 = scalar_select %p45, %s46, %s47
      %p51 = pneg %p45
      %p52 = scmp.eq.s32.totalorder %s22, 1
      %p53 = por %p51, %p52
      %p54 = scmp.ne.s32.totalorder %s46, %s49
      %p55 = scmp.eq.s32.totalorder %s22, 0
      %p56 = por %p54, %p55
      %p57 = scmp.ne.s32.totalorder %s46, %s49
      %p58 = scmp.eq.s32.totalorder %s27, 1
      %p59 = por %p57, %p58
      %p60 = scmp.ne.s32.totalorder %s49, %s50
      %p61 = scmp.eq.s32.totalorder %s27, 0
      %p62 = por %p60, %p61
      %p63 = scmp.ne.s32.totalorder %s49, %s50
      %p64 = scmp.eq.s32.totalorder %s28, 1
      %p65 = por %p63, %p64
      %p67 = scmp.ne.s32.totalorder %s50, %s66
      %p68 = scmp.eq.s32.totalorder %s28, 0
      %p69 = por %p67, %p68
      %s70 = ssub.s32 %s29, %s41
      %s71 = ssub.s32 %s30, %s37
      %s72 = sor.u32 %s70, %s71
      %p73 = scmp.eq.s32.totalorder %s72, 0
      %s75 = sadd.s32 %s74, 1
      %s76 = scalar_select %p73, %s74, %s75
      %p79 = pneg %p73
      %p80 = scmp.eq.s32.totalorder %s22, 1
      %p81 = por %p79, %p80
      %p82 = scmp.ne.s32.totalorder %s74, %s77
      %p83 = scmp.eq.s32.totalorder %s22, 0
      %p84 = por %p82, %p83
      %p85 = scmp.ne.s32.totalorder %s74, %s77
      %p86 = scmp.eq.s32.totalorder %s27, 1
      %p87 = por %p85, %p86
      %p88 = scmp.ne.s32.totalorder %s77, %s78
      %p89 = scmp.eq.s32.totalorder %s27, 0
      %p90 = por %p88, %p89
      %p91 = scmp.ne.s32.totalorder %s77, %s78
      %p92 = scmp.eq.s32.totalorder %s28, 1
      %p93 = por %p91, %p92
      %p95 = scmp.ne.s32.totalorder %s78, %s94
      %p96 = scmp.eq.s32.totalorder %s28, 0
      %p97 = por %p95, %p96
      %s99 = sadd.s32 %s98, 1
      %p102 = scmp.eq.s32.totalorder %s22, 1
      %p103 = scmp.ne.s32.totalorder %s98, %s100
      %p104 = scmp.eq.s32.totalorder %s22, 0
      %p105 = por %p103, %p104
      %p106 = scmp.ne.s32.totalorder %s98, %s100
      %p107 = scmp.eq.s32.totalorder %s27, 1
      %p108 = por %p106, %p107
      %p109 = scmp.ne.s32.totalorder %s100, %s101
      %p110 = scmp.eq.s32.totalorder %s27, 0
      %p111 = por %p109, %p110
      %p112 = scmp.ne.s32.totalorder %s100, %s101
      %p113 = scmp.eq.s32.totalorder %s28, 1
      %p114 = por %p112, %p113
      %p116 = scmp.ne.s32.totalorder %s101, %s115
      %p117 = scmp.eq.s32.totalorder %s28, 0
      %p118 = por %p116, %p117
      %s120 = sadd.s32 %s119, 1
      %p123 = scmp.eq.s32.totalorder %s22, 1
      %p124 = scmp.ne.s32.totalorder %s119, %s121
      %p125 = scmp.eq.s32.totalorder %s22, 0
      %p126 = por %p124, %p125
      %p127 = scmp.ne.s32.totalorder %s119, %s121
      %p128 = scmp.eq.s32.totalorder %s27, 1
      %p129 = por %p127, %p128
      %p130 = scmp.ne.s32.totalorder %s121, %s122
      %p131 = scmp.eq.s32.totalorder %s27, 0
      %p132 = por %p130, %p131
      %p133 = scmp.ne.s32.totalorder %s121, %s122
      %p134 = scmp.eq.s32.totalorder %s28, 1
      %p135 = por %p133, %p134
      %p137 = scmp.ne.s32.totalorder %s122, %s136
      %p138 = scmp.eq.s32.totalorder %s28, 0
      %p139 = por %p137, %p138
      %s141 = sadd.s32 %s140, 1
      %p144 = scmp.eq.s32.totalorder %s22, 1
      %p145 = scmp.ne.s32.totalorder %s140, %s142
      %p146 = scmp.eq.s32.totalorder %s22, 0
      %p147 = por %p145, %p146
      %p148 = scmp.ne.s32.totalorder %s140, %s142
      %p149 = scmp.eq.s32.totalorder %s27, 1
      %p150 = por %p148, %p149
      %p151 = scmp.ne.s32.totalorder %s142, %s143
      %p152 = scmp.eq.s32.totalorder %s27, 0
      %p153 = por %p151, %p152
      %p154 = scmp.ne.s32.totalorder %s142, %s143
      %p155 = scmp.eq.s32.totalorder %s28, 1
      %p156 = por %p154, %p155
      %p158 = scmp.ne.s32.totalorder %s143, %s157
      %p159 = scmp.eq.s32.totalorder %s28, 0
      %p160 = por %p158, %p159
      %s162 = sadd.s32 %s161, 1
      %p165 = scmp.eq.s32.totalorder %s22, 1
      %p166 = scmp.ne.s32.totalorder %s161, %s163
      %p167 = scmp.eq.s32.totalorder %s22, 0
      %p168 = por %p166, %p167
      %p169 = scmp.ne.s32.totalorder %s161, %s163
      %p170 = scmp.eq.s32.totalorder %s27, 1
      %p171 = por %p169, %p170
      %p172 = scmp.ne.s32.totalorder %s163, %s164
      %p173 = scmp.eq.s32.totalorder %s27, 0
      %p174 = por %p172, %p173
      %p175 = scmp.ne.s32.totalorder %s163, %s164
      %p176 = scmp.eq.s32.totalorder %s28, 1
      %p177 = por %p175, %p176
      %p179 = scmp.ne.s32.totalorder %s164, %s178
      %p180 = scmp.eq.s32.totalorder %s28, 0
      %p181 = por %p179, %p180
      %s182 = ssub.s32 %s29, %s41
      %s183 = ssub.s32 %s30, %s37
      %s184 = sor.u32 %s182, %s183
      %p185 = scmp.eq.s32.totalorder %s184, 0
      %s187 = sadd.s32 %s186, 1
      %s188 = scalar_select %p185, %s186, %s187
      %p191 = pneg %p185
      %p192 = scmp.eq.s32.totalorder %s22, 1
      %p193 = por %p191, %p192
      %p194 = scmp.ne.s32.totalorder %s186, %s189
      %p195 = scmp.eq.s32.totalorder %s22, 0
      %p196 = por %p194, %p195
      %p197 = scmp.ne.s32.totalorder %s186, %s189
      %p198 = scmp.eq.s32.totalorder %s27, 1
      %p199 = por %p197, %p198
      %p200 = scmp.ne.s32.totalorder %s189, %s190
      %p201 = scmp.eq.s32.totalorder %s27, 0
      %p202 = por %p200, %p201
      %p203 = scmp.ne.s32.totalorder %s189, %s190
      %p204 = scmp.eq.s32.totalorder %s28, 1
      %p205 = por %p203, %p204
      %p207 = scmp.ne.s32.totalorder %s190, %s206
      %p208 = scmp.eq.s32.totalorder %s28, 0
      %p209 = por %p207, %p208
      %p210 = scmp.le.s32.totalorder 1, %s22
      %p211 = scmp.lt.s32.totalorder %s22, 3
      %p212 = pnand %p210, %p211
      %p213 = pneg %p212
      // Predicated region
      $region9: #{tpu_custom_call.1} parent=5 // pred_check
        _
      $region10: #{tpu_custom_call.1} parent=5 // pred_check_branch
        %215 = sbr.rel (%p212) target = $region12
      $region11: #{tpu_custom_call.1} parent=5 // pred_region
        %s216 = ssub.s32 %s22, 1
        // Predicated region
        $region13: #{tpu_custom_call.1} parent=11 // pred_check
          %p217 = pneg %p111
        $region14: #{tpu_custom_call.1} parent=11 // pred_check_branch
          %219 = sbr.rel (%p217) target = $region16
        $region15: #{tpu_custom_call.1} parent=11 // pred_region
          %s221 = ssub.s32 6144, 6144
          %222 = vsyncadd [#allocation6], %s221
          %s223 = sshll.u32 [#allocation7], 4
          %s224 = int_to_ptr.vmem [resolvable:$true] %s223
          %229 = dma.hbm_to_vmem [thread:$0]  %s2, 6144, %s224, [#allocation6], 128, 128, 8
        $region16: #{tpu_custom_call.1} parent=11 // pred_fallthru
          _
        // Predicated region
        $region17: #{tpu_custom_call.1} parent=11 // pred_check
          %p230 = pneg %p132
        $region18: #{tpu_custom_call.1} parent=11 // pred_check_branch
          %232 = sbr.rel (%p230) target = $region20
        $region19: #{tpu_custom_call.1} parent=11 // pred_region
          _
        $region20: #{tpu_custom_call.1} parent=11 // pred_fallthru
          _
        // Predicated region
        $region21: #{tpu_custom_call.1} parent=11 // pred_check
          %p233 = pneg %p153
        $region22: #{tpu_custom_call.1} parent=11 // pred_check_branch
          %235 = sbr.rel (%p233) target = $region24
        $region23: #{tpu_custom_call.1} parent=11 // pred_region
          %s237 = ssub.s32 2048, 2048
          %238 = vsyncadd [#allocation9], %s237
          %s239 = sshll.u32 [#allocation8], 4
          %s240 = int_to_ptr.vmem [resolvable:$true] %s239
          %245 = dma.hbm_to_vmem [thread:$0]  %s4, 2048, %s240, [#allocation9], 128, 128, 8
        $region24: #{tpu_custom_call.1} parent=11 // pred_fallthru
          _
        // Predicated region
        $region25: #{tpu_custom_call.1} parent=11 // pred_check
          %p246 = pneg %p174
        $region26: #{tpu_custom_call.1} parent=11 // pred_check_branch
          %248 = sbr.rel (%p246) target = $region28
        $region27: #{tpu_custom_call.1} parent=11 // pred_region
          _
        $region28: #{tpu_custom_call.1} parent=11 // pred_fallthru
          _
      $region12: #{tpu_custom_call.1} parent=5 // pred_fallthru
        _
      %p249 = scmp.lt.s32.totalorder %s22, 2
      // Predicated region
      $region29: #{tpu_custom_call.1} parent=5 // pred_check
        %p250 = pneg %p249
      $region30: #{tpu_custom_call.1} parent=5 // pred_check_branch
        %252 = sbr.rel (%p250) target = $region32
      $region31: #{tpu_custom_call.1} parent=5 // pred_region
        // Predicated region
        $region33: #{tpu_custom_call.1} parent=31 // pred_check
          %p253 = pneg %p56
        $region34: #{tpu_custom_call.1} parent=31 // pred_check_branch
          %255 = sbr.rel (%p253) target = $region36
        $region35: #{tpu_custom_call.1} parent=31 // pred_region
          %s256 = sand.u32 %s46, 1
          %s257 = scalar_lea.sflag [#allocation3], %s256
          %s258 = sand.u32 %s46, 1
          %s259 = smul.addr %s258, 16
          %s260 = scalar_lea.vmem [#allocation2], %s259
          %s261 = smul.u32 2, %s30
          %s263 = ssub.s32 256, 256
          %264 = vsyncadd %s257, %s263
          %s265 = smul.addr %s29, 2
          %s266 = sadd.s32 %s261, %s265
          %s267 = smul.addr %s266, 128
          %s268 = scalar_lea.hbm %s0, %s267
          %s269 = sshll.u32 %s260, 4
          %s270 = int_to_ptr.vmem [resolvable:$true] %s269
          %275 = dma.hbm_to_vmem [thread:$0]  %s268, 256, %s270, %s257, 128, 128, 8
        $region36: #{tpu_custom_call.1} parent=31 // pred_fallthru
          _
        // Predicated region
        $region37: #{tpu_custom_call.1} parent=31 // pred_check
          %p276 = pneg %p84
        $region38: #{tpu_custom_call.1} parent=31 // pred_check_branch
          %278 = sbr.rel (%p276) target = $region40
        $region39: #{tpu_custom_call.1} parent=31 // pred_region
          %s279 = sand.u32 %s22, 1
          %s280 = scalar_lea.sflag [#allocation6], %s279
          %s281 = sand.u32 %s74, 1
          %s282 = smul.addr %s281, 2
          %s283 = scalar_lea.vmem [#allocation5], %s282
          %s285 = ssub.s32 32, 32
          %286 = vsyncadd %s280, %s285
          %s287 = sadd.s32 %s30, %s29
          %s288 = smul.addr %s287, 32
          %s289 = scalar_lea.hbm %s1, %s288
          %s291 = sshll.u32 %s283, 4
          %s292 = int_to_ptr.vmem [resolvable:$true] %s291
          %294 = dma.hbm_to_vmem [thread:$0]  %s289, 32, %s292, %s280
        $region40: #{tpu_custom_call.1} parent=31 // pred_fallthru
          _
      $region32: #{tpu_custom_call.1} parent=5 // pred_fallthru
        _
      %p295 = scmp.le.s32.totalorder 1, %s22
      %p296 = scmp.lt.s32.totalorder %s22, 3
      %p297 = pnand %p295, %p296
      %p298 = pneg %p297
      // Predicated region
      $region41: #{tpu_custom_call.1} parent=5 // pred_check
        _
      $region42: #{tpu_custom_call.1} parent=5 // pred_check_branch
        %300 = sbr.rel (%p297) target = $region44
      $region43: #{tpu_custom_call.1} parent=5 // pred_region
        %s301 = ssub.s32 %s22, 1
        %s302 = sand.u32 %s49, 1
        %s303 = scalar_lea.sflag [#allocation3], %s302
        %s304 = sand.u32 %s49, 1
        %s305 = smul.addr %s304, 16
        %s306 = scalar_lea.vmem [#allocation2], %s305
        // Predicated region
        $region45: #{tpu_custom_call.1} parent=43 // pred_check
          %p307 = pneg %p62
        $region46: #{tpu_custom_call.1} parent=43 // pred_check_branch
          %309 = sbr.rel (%p307) target = $region48
        $region47: #{tpu_custom_call.1} parent=43 // pred_region
          %310 = dma.done %s303, 256
        $region48: #{tpu_custom_call.1} parent=43 // pred_fallthru
          _
        %s311 = sand.u32 %s27, 1
        %s312 = scalar_lea.sflag [#allocation6], %s311
        %s313 = sand.u32 %s77, 1
        %s314 = smul.addr %s313, 2
        %s315 = scalar_lea.vmem [#allocation5], %s314
        // Predicated region
        $region49: #{tpu_custom_call.1} parent=43 // pred_check
          %p316 = pneg %p90
        $region50: #{tpu_custom_call.1} parent=43 // pred_check_branch
          %318 = sbr.rel (%p316) target = $region52
        $region51: #{tpu_custom_call.1} parent=43 // pred_region
          %319 = dma.done %s312, 32
        $region52: #{tpu_custom_call.1} parent=43 // pred_fallthru
          _
        // Predicated region
        $region53: #{tpu_custom_call.1} parent=43 // pred_check
          %p320 = pneg %p111
        $region54: #{tpu_custom_call.1} parent=43 // pred_check_branch
          %322 = sbr.rel (%p320) target = $region56
        $region55: #{tpu_custom_call.1} parent=43 // pred_region
          %323 = dma.done [#allocation6], 6144
        $region56: #{tpu_custom_call.1} parent=43 // pred_fallthru
          _
        // Predicated region
        $region57: #{tpu_custom_call.1} parent=43 // pred_check
          %p324 = pneg %p153
        $region58: #{tpu_custom_call.1} parent=43 // pred_check_branch
          %326 = sbr.rel (%p324) target = $region60
        $region59: #{tpu_custom_call.1} parent=43 // pred_region
          %327 = dma.done [#allocation9], 2048
        $region60: #{tpu_custom_call.1} parent=43 // pred_fallthru
          _
        %s328 = sand.u32 %s49, 1
        %s329 = scalar_lea.sflag [#allocation3], %s328
        %s330 = sand.u32 %s49, 1
        %s331 = smul.addr %s330, 16
        %s332 = scalar_lea.vmem [#allocation2], %s331
        %p333 = pneg %p62
        %p334 = pneg %p59
        %s335 = sand.u32 %s27, 1
        %s336 = scalar_lea.sflag [#allocation6], %s335
        %s337 = sand.u32 %s77, 1
        %s338 = smul.addr %s337, 2
        %s339 = scalar_lea.vmem [#allocation5], %s338
        %p340 = pneg %p90
        %p341 = pneg %p87
        %p342 = pneg %p111
        %p343 = pneg %p108
        %p344 = pneg %p132
        %p345 = pneg %p129
        %p346 = pneg %p153
        %p347 = pneg %p150
        %p348 = pneg %p174
        %p349 = pneg %p171
        %p350 = pneg %p202
        %p351 = pneg %p199
        %s352 = sand.u32 %s189, 1
        %s353 = scalar_lea.sflag [#allocation4], %s352
        %s354 = sand.u32 %s189, 1
        %s355 = smul.addr %s354, 16
        %s356 = scalar_lea.vmem [#allocation10], %s355
        %s357 = smul.u32 2, %s32
        %s358 = smul.u32 2, %s32
        %v359 = vld [vmem:[%s306] sm:$0xff]
        %v360 = vld [vmem:[%s306 + $0x8] sm:$0xff]
        %v361 = vld [vmem:[%s315] sm:$0x3]
        %vm364 = vcmask 1040384
        %v365 = vrot.slane %v359, 7
        %v366 = vrot.slane %v360, 7
        %v367 = vsel %vm364, %v365, %v366
        %v371 = vsel %vm364, %v361, %v365
        %v372 = vsel %vm364, %v366, %v361
        %vm375 = vcmask 1046528
        %v376 = vrot.slane %v371, 1
        %v377 = vrot.slane %v367, 1
        %v378 = vsel %vm375, %v376, %v377
        %v379 = vrot.slane %v372, 1
        %v380 = vsel %vm375, %v377, %v379
        %vm383 = vcmask 1045504
        %v384 = vrot.slane %v371, 2
        %v385 = vrot.slane %v367, 2
        %v386 = vsel %vm383, %v384, %v385
        %v387 = vrot.slane %v372, 2
        %v388 = vsel %vm383, %v385, %v387
        %v391 = vld [vmem:[#allocation7] sm:$0xff]
        %v392 = vld [vmem:[#allocation7 + $0x8] sm:$0xff]
        %v393 = vld [vmem:[#allocation7 + $0x10] sm:$0xff]
        %v394 = vld [vmem:[#allocation7 + $0x18] sm:$0xff]
        %v395 = vld [vmem:[#allocation7 + $0x20] sm:$0xff]
        %v396 = vld [vmem:[#allocation7 + $0x28] sm:$0xff]
        %v397 = vld [vmem:[#allocation7 + $0x30] sm:$0xff]
        %v398 = vld [vmem:[#allocation7 + $0x38] sm:$0xff]
        %v399 = vld [vmem:[#allocation7 + $0x40] sm:$0xff]
        %v400 = vld [vmem:[#allocation7 + $0x48] sm:$0xff]
        %v401 = vld [vmem:[#allocation7 + $0x50] sm:$0xff]
        %v402 = vld [vmem:[#allocation7 + $0x58] sm:$0xff]
        %v403 = vld [vmem:[#allocation7 + $0x60] sm:$0xff]
        %v404 = vld [vmem:[#allocation7 + $0x68] sm:$0xff]
        %v405 = vld [vmem:[#allocation7 + $0x70] sm:$0xff]
        %v406 = vld [vmem:[#allocation7 + $0x78] sm:$0xff]
        %v407 = vld [vmem:[#allocation7 + $0x80] sm:$0xff]
        %v408 = vld [vmem:[#allocation7 + $0x88] sm:$0xff]
        %v409 = vld [vmem:[#allocation7 + $0x90] sm:$0xff]
        %v410 = vld [vmem:[#allocation7 + $0x98] sm:$0xff]
        %v411 = vld [vmem:[#allocation7 + $0xa0] sm:$0xff]
        %v412 = vld [vmem:[#allocation7 + $0xa8] sm:$0xff]
        %v413 = vld [vmem:[#allocation7 + $0xb0] sm:$0xff]
        %v414 = vld [vmem:[#allocation7 + $0xb8] sm:$0xff]
        %v415 = vld [vmem:[#allocation7 + $0xc0] sm:$0xff]
        %v416 = vld [vmem:[#allocation7 + $0xc8] sm:$0xff]
        %v417 = vld [vmem:[#allocation7 + $0xd0] sm:$0xff]
        %v418 = vld [vmem:[#allocation7 + $0xd8] sm:$0xff]
        %v419 = vld [vmem:[#allocation7 + $0xe0] sm:$0xff]
        %v420 = vld [vmem:[#allocation7 + $0xe8] sm:$0xff]
        %v421 = vld [vmem:[#allocation7 + $0xf0] sm:$0xff]
        %v422 = vld [vmem:[#allocation7 + $0xf8] sm:$0xff]
        %v423 = vld [vmem:[#allocation7 + $0x100] sm:$0xff]
        %v424 = vld [vmem:[#allocation7 + $0x108] sm:$0xff]
        %v425 = vld [vmem:[#allocation7 + $0x110] sm:$0xff]
        %v426 = vld [vmem:[#allocation7 + $0x118] sm:$0xff]
        %v427 = vld [vmem:[#allocation7 + $0x120] sm:$0xff]
        %v428 = vld [vmem:[#allocation7 + $0x128] sm:$0xff]
        %v429 = vld [vmem:[#allocation7 + $0x130] sm:$0xff]
        %v430 = vld [vmem:[#allocation7 + $0x138] sm:$0xff]
        %v431 = vld [vmem:[#allocation7 + $0x140] sm:$0xff]
        %v432 = vld [vmem:[#allocation7 + $0x148] sm:$0xff]
        %v433 = vld [vmem:[#allocation7 + $0x150] sm:$0xff]
        %v434 = vld [vmem:[#allocation7 + $0x158] sm:$0xff]
        %v435 = vld [vmem:[#allocation7 + $0x160] sm:$0xff]
        %v436 = vld [vmem:[#allocation7 + $0x168] sm:$0xff]
        %v437 = vld [vmem:[#allocation7 + $0x170] sm:$0xff]
        %v438 = vld [vmem:[#allocation7 + $0x178] sm:$0xff]
        %v439 = vld [vmem:[%s3] sm:$0x1]
        %v441 = vlaneseq
        %v442 = vshrl.u32 %v441, 7
        %v443 = vsub.s32 0, %v442
        %v444 = vrot.slane %v439, %v443
        %446 = vmatprep.subr.mxu0 0.0
        %447 = vmatpush1.msra.mxu0 %v391
        %448 = vmatprep.subr.mxu0 0.0
        %449 = vmatpush1.msra.mxu0 %v392
        %450 = vmatprep.subr.mxu0 0.0
        %451 = vmatpush1.msra.mxu0 %v393
        %452 = vmatprep.subr.mxu0 0.0
        %453 = vmatpush1.msra.mxu0 %v394
        %454 = vmatprep.subr.mxu0 0.0
        %455 = vmatpush1.msra.mxu0 %v395
        %456 = vmatprep.subr.mxu0 0.0
        %457 = vmatpush1.msra.mxu0 %v396
        %458 = vmatprep.subr.mxu0 0.0
        %459 = vmatpush1.msra.mxu0 %v397
        %460 = vmatprep.subr.mxu0 0.0
        %461 = vmatpush1.msra.mxu0 %v398
        %462 = vmatprep.subr.mxu0 0.0
        %463 = vmatpush1.msra.mxu0 %v399
        %464 = vmatprep.subr.mxu0 0.0
        %465 = vmatpush1.msra.mxu0 %v400
        %466 = vmatprep.subr.mxu0 0.0
        %467 = vmatpush1.msra.mxu0 %v401
        %468 = vmatprep.subr.mxu0 0.0
        %469 = vmatpush1.msra.mxu0 %v402
        %470 = vmatprep.subr.mxu0 0.0
        %471 = vmatpush1.msra.mxu0 %v403
        %472 = vmatprep.subr.mxu0 0.0
        %473 = vmatpush1.msra.mxu0 %v404
        %474 = vmatprep.subr.mxu0 0.0
        %475 = vmatpush1.msra.mxu0 %v405
        %476 = vmatprep.subr.mxu0 0.0
        %477 = vmatpush1.msra.mxu0 %v406
        %478 = vmatprep.subr.mxu0 0.0
        %479 = vmatpush1.msra.mxu0 %v407
        %480 = vmatprep.subr.mxu0 0.0
        %481 = vmatpush1.msra.mxu0 %v408
        %482 = vmatprep.subr.mxu0 0.0
        %483 = vmatpush1.msra.mxu0 %v409
        %484 = vmatprep.subr.mxu0 0.0
        %485 = vmatpush1.msra.mxu0 %v410
        %486 = vmatprep.subr.mxu0 0.0
        %487 = vmatpush1.msra.mxu0 %v411
        %488 = vmatprep.subr.mxu0 0.0
        %489 = vmatpush1.msra.mxu0 %v412
        %490 = vmatprep.subr.mxu0 0.0
        %491 = vmatpush1.msra.mxu0 %v413
        %492 = vmatprep.subr.mxu0 0.0
        %493 = vmatpush1.msra.mxu0 %v414
        %494 = vmatprep.subr.mxu0 0.0
        %495 = vmatpush1.msra.mxu0 %v415
        %496 = vmatprep.subr.mxu0 0.0
        %497 = vmatpush1.msra.mxu0 %v416
        %498 = vmatprep.subr.mxu0 0.0
        %499 = vmatpush1.msra.mxu0 %v417
        %500 = vmatprep.subr.mxu0 0.0
        %501 = vmatpush1.msra.mxu0 %v418
        %502 = vmatprep.subr.mxu0 0.0
        %503 = vmatpush1.msra.mxu0 %v419
        %504 = vmatprep.subr.mxu0 0.0
        %505 = vmatpush1.msra.mxu0 %v420
        %506 = vmatprep.subr.mxu0 0.0
        %507 = vmatpush1.msra.mxu0 %v421
        %508 = vmatprep.subr.mxu0 0.0
        %509 = vmatpush1.msra.mxu0 %v422
        %510 = vmatprep.mubr.f32.mxu0 %v378
        %511 = vmatmul.mubr.f32.gmra.mrb[0].mxu0 %v371
        %v512 = vpop.f32.mrb[0].mxu0
        %v513 = vadd.f32 %v444, %v512
        %v514 = vpop.f32.mrb[0].mxu0
        %515 = vmatprep.mubr.f32.mxu0 %v380
        %516 = vmatmul.mubr.f32.gmra.mrb[0].mxu0 %v367
        %v517 = vpop.f32.mrb[0].mxu0
        %v518 = vadd.f32 %v444, %v517
        %v519 = vpop.f32.mrb[0].mxu0
        %520 = vdwg.mxu0
        %521 = vmatprep.subr.mxu0 0.0
        %522 = vmatpush1.msra.mxu0 %v423
        %523 = vmatprep.subr.mxu0 0.0
        %524 = vmatpush1.msra.mxu0 %v424
        %525 = vmatprep.subr.mxu0 0.0
        %526 = vmatpush1.msra.mxu0 %v425
        %527 = vmatprep.subr.mxu0 0.0
        %528 = vmatpush1.msra.mxu0 %v426
        %529 = vmatprep.subr.mxu0 0.0
        %530 = vmatpush1.msra.mxu0 %v427
        %531 = vmatprep.subr.mxu0 0.0
        %532 = vmatpush1.msra.mxu0 %v428
        %533 = vmatprep.subr.mxu0 0.0
        %534 = vmatpush1.msra.mxu0 %v429
        %535 = vmatprep.subr.mxu0 0.0
        %536 = vmatpush1.msra.mxu0 %v430
        %537 = vmatprep.subr.mxu0 0.0
        %538 = vmatpush1.msra.mxu0 %v431
        %539 = vmatprep.subr.mxu0 0.0
        %540 = vmatpush1.msra.mxu0 %v432
        %541 = vmatprep.subr.mxu0 0.0
        %542 = vmatpush1.msra.mxu0 %v433
        %543 = vmatprep.subr.mxu0 0.0
        %544 = vmatpush1.msra.mxu0 %v434
        %545 = vmatprep.subr.mxu0 0.0
        %546 = vmatpush1.msra.mxu0 %v435
        %547 = vmatprep.subr.mxu0 0.0
        %548 = vmatpush1.msra.mxu0 %v436
        %549 = vmatprep.subr.mxu0 0.0
        %550 = vmatpush1.msra.mxu0 %v437
        %551 = vmatprep.subr.mxu0 0.0
        %552 = vmatpush1.msra.mxu0 %v438
        %553 = vmatprep.subr.mxu0 0.0
        %554 = vmatpush1.msra.mxu0 0.0
        %555 = vmatprep.subr.mxu0 0.0
        %556 = vmatpush1.msra.mxu0 0.0
        %557 = vmatprep.subr.mxu0 0.0
        %558 = vmatpush1.msra.mxu0 0.0
        %559 = vmatprep.subr.mxu0 0.0
        %560 = vmatpush1.msra.mxu0 0.0
        %561 = vmatprep.subr.mxu0 0.0
        %562 = vmatpush1.msra.mxu0 0.0
        %563 = vmatprep.subr.mxu0 0.0
        %564 = vmatpush1.msra.mxu0 0.0
        %565 = vmatprep.subr.mxu0 0.0
        %566 = vmatpush1.msra.mxu0 0.0
        %567 = vmatprep.subr.mxu0 0.0
        %568 = vmatpush1.msra.mxu0 0.0
        %569 = vmatprep.subr.mxu0 0.0
        %570 = vmatpush1.msra.mxu0 0.0
        %571 = vmatprep.subr.mxu0 0.0
        %572 = vmatpush1.msra.mxu0 0.0
        %573 = vmatprep.subr.mxu0 0.0
        %574 = vmatpush1.msra.mxu0 0.0
        %575 = vmatprep.subr.mxu0 0.0
        %576 = vmatpush1.msra.mxu0 0.0
        %577 = vmatprep.subr.mxu0 0.0
        %578 = vmatpush1.msra.mxu0 0.0
        %579 = vmatprep.subr.mxu0 0.0
        %580 = vmatpush1.msra.mxu0 0.0
        %581 = vmatprep.subr.mxu0 0.0
        %582 = vmatpush1.msra.mxu0 0.0
        %583 = vmatprep.subr.mxu0 0.0
        %584 = vmatpush1.msra.mxu0 0.0
        %585 = vmatprep.mubr.f32.mxu0 0.0
        %586 = vmatmul.mubr.f32.gmra.mrb[0].mxu0 %v386
        %v587 = vpop.f32.mrb[0].mxu0
        %v588 = vadd.f32 %v513, %v587
        %v589 = vpop.f32.mrb[0].mxu0
        %590 = vmatprep.mubr.f32.mxu0 0.0
        %591 = vmatmul.mubr.f32.gmra.mrb[0].mxu0 %v388
        %v592 = vpop.f32.mrb[0].mxu0
        %v593 = vadd.f32 %v518, %v592
        %v594 = vpop.f32.mrb[0].mxu0
        %595 = vdwg.mxu0
        %v596 = vmin.f32 %v588, 30.0
        %v597 = vmin.f32 %v593, 30.0
        %v598 = vmul.f32 %v596, 1.442695
        %v599 = vpow.pop %v598
        %v600 = vmul.f32 %v597, 1.442695
        %v601 = vpow.pop %v600
        %v602 = vadd.f32 %v599, 1.0
        %v603 = vadd.f32 %v601, 1.0
        %v604 = vmul.f32 %v602, %v602
        %v605 = vmul.f32 %v603, %v603
        %v606 = vsub.f32 %v604, 1.0
        %v607 = vsub.f32 %v605, 1.0
        %v608 = vmul.f32 %v588, %v606
        %v609 = vmul.f32 %v593, %v607
        %v610 = vadd.f32 %v604, 1.0
        %v611 = vadd.f32 %v605, 1.0
        %v612 = vrcp.pop %v610
        %v613 = vmul.f32 %v608, %v612
        %v614 = vrcp.pop %v611
        %v615 = vmul.f32 %v609, %v614
        %v616 = vld [vmem:[#allocation8] sm:$0xff]
        %v617 = vld [vmem:[#allocation8 + $0x8] sm:$0xff]
        %v618 = vld [vmem:[#allocation8 + $0x10] sm:$0xff]
        %v619 = vld [vmem:[#allocation8 + $0x18] sm:$0xff]
        %v620 = vld [vmem:[#allocation8 + $0x20] sm:$0xff]
        %v621 = vld [vmem:[#allocation8 + $0x28] sm:$0xff]
        %v622 = vld [vmem:[#allocation8 + $0x30] sm:$0xff]
        %v623 = vld [vmem:[#allocation8 + $0x38] sm:$0xff]
        %v624 = vld [vmem:[#allocation8 + $0x40] sm:$0xff]
        %v625 = vld [vmem:[#allocation8 + $0x48] sm:$0xff]
        %v626 = vld [vmem:[#allocation8 + $0x50] sm:$0xff]
        %v627 = vld [vmem:[#allocation8 + $0x58] sm:$0xff]
        %v628 = vld [vmem:[#allocation8 + $0x60] sm:$0xff]
        %v629 = vld [vmem:[#allocation8 + $0x68] sm:$0xff]
        %v630 = vld [vmem:[#allocation8 + $0x70] sm:$0xff]
        %v631 = vld [vmem:[#allocation8 + $0x78] sm:$0xff]
        %v632 = vld [vmem:[%s5] sm:$0x1]
        %v634 = vlaneseq
        %v635 = vshrl.u32 %v634, 7
        %v636 = vsub.s32 0, %v635
        %v637 = vrot.slane %v632, %v636
        %639 = vmatprep.subr.mxu0 0.0
        %640 = vmatpush1.msra.mxu0 %v616
        %641 = vmatprep.subr.mxu0 0.0
        %642 = vmatpush1.msra.mxu0 %v617
        %643 = vmatprep.subr.mxu0 0.0
        %644 = vmatpush1.msra.mxu0 %v618
        %645 = vmatprep.subr.mxu0 0.0
        %646 = vmatpush1.msra.mxu0 %v619
        %647 = vmatprep.subr.mxu0 0.0
        %648 = vmatpush1.msra.mxu0 %v620
        %649 = vmatprep.subr.mxu0 0.0
        %650 = vmatpush1.msra.mxu0 %v621
        %651 = vmatprep.subr.mxu0 0.0
        %652 = vmatpush1.msra.mxu0 %v622
        %653 = vmatprep.subr.mxu0 0.0
        %654 = vmatpush1.msra.mxu0 %v623
        %655 = vmatprep.subr.mxu0 0.0
        %656 = vmatpush1.msra.mxu0 %v624
        %657 = vmatprep.subr.mxu0 0.0
        %658 = vmatpush1.msra.mxu0 %v625
        %659 = vmatprep.subr.mxu0 0.0
        %660 = vmatpush1.msra.mxu0 %v626
        %661 = vmatprep.subr.mxu0 0.0
        %662 = vmatpush1.msra.mxu0 %v627
        %663 = vmatprep.subr.mxu0 0.0
        %664 = vmatpush1.msra.mxu0 %v628
        %665 = vmatprep.subr.mxu0 0.0
        %666 = vmatpush1.msra.mxu0 %v629
        %667 = vmatprep.subr.mxu0 0.0
        %668 = vmatpush1.msra.mxu0 %v630
        %669 = vmatprep.subr.mxu0 0.0
        %670 = vmatpush1.msra.mxu0 %v631
        %671 = vmatprep.subr.mxu0 0.0
        %672 = vmatpush1.msra.mxu0 0.0
        %673 = vmatprep.subr.mxu0 0.0
        %674 = vmatpush1.msra.mxu0 0.0
        %675 = vmatprep.subr.mxu0 0.0
        %676 = vmatpush1.msra.mxu0 0.0
        %677 = vmatprep.subr.mxu0 0.0
        %678 = vmatpush1.msra.mxu0 0.0
        %679 = vmatprep.subr.mxu0 0.0
        %680 = vmatpush1.msra.mxu0 0.0
        %681 = vmatprep.subr.mxu0 0.0
        %682 = vmatpush1.msra.mxu0 0.0
        %683 = vmatprep.subr.mxu0 0.0
        %684 = vmatpush1.msra.mxu0 0.0
        %685 = vmatprep.subr.mxu0 0.0
        %686 = vmatpush1.msra.mxu0 0.0
        %687 = vmatprep.subr.mxu0 0.0
        %688 = vmatpush1.msra.mxu0 0.0
        %689 = vmatprep.subr.mxu0 0.0
        %690 = vmatpush1.msra.mxu0 0.0
        %691 = vmatprep.subr.mxu0 0.0
        %692 = vmatpush1.msra.mxu0 0.0
        %693 = vmatprep.subr.mxu0 0.0
        %694 = vmatpush1.msra.mxu0 0.0
        %695 = vmatprep.subr.mxu0 0.0
        %696 = vmatpush1.msra.mxu0 0.0
        %697 = vmatprep.subr.mxu0 0.0
        %698 = vmatpush1.msra.mxu0 0.0
        %699 = vmatprep.subr.mxu0 0.0
        %700 = vmatpush1.msra.mxu0 0.0
        %701 = vmatprep.subr.mxu0 0.0
        %702 = vmatpush1.msra.mxu0 0.0
        %703 = vmatprep.mubr.f32.mxu0 0.0
        %704 = vmatmul.mubr.f32.gmra.mrb[0].mxu0 %v613
        %v705 = vpop.f32.mrb[0].mxu0
        %v706 = vadd.f32 %v637, %v705
        %v707 = vpop.f32.mrb[0].mxu0
        %708 = vmatprep.mubr.f32.mxu0 0.0
        %709 = vmatmul.mubr.f32.gmra.mrb[0].mxu0 %v615
        %v710 = vpop.f32.mrb[0].mxu0
        %v711 = vadd.f32 %v637, %v710
        %v712 = vpop.f32.mrb[0].mxu0
        %713 = vdwg.mxu0
        %v714 = vadd.f32 %v706, %v359
        %v715 = vadd.f32 %v711, %v360
        %716 = vst [vmem:[%s356] sm:$0xff] %v714
        %717 = vst [vmem:[%s356 + $0x8] sm:$0xff] %v715
        %s718 = sand.u32 %s189, 1
        %s719 = scalar_lea.sflag [#allocation4], %s718
        %s720 = sand.u32 %s189, 1
        %s721 = smul.addr %s720, 16
        %s722 = scalar_lea.vmem [#allocation10], %s721
        // Predicated region
        $region61: #{tpu_custom_call.1} parent=43 // pred_check
          %p723 = pneg %p199
        $region62: #{tpu_custom_call.1} parent=43 // pred_check_branch
          %725 = sbr.rel (%p723) target = $region64
        $region63: #{tpu_custom_call.1} parent=43 // pred_region
          %s726 = smul.u32 2, %s32
          %s728 = ssub.s32 256, 256
          %729 = vsyncadd %s719, %s728
          %s730 = smul.addr %s31, 2
          %s731 = sadd.s32 %s726, %s730
          %s732 = smul.addr %s731, 128
          %s733 = scalar_lea.hbm %s6, %s732
          %s734 = sshll.u32 %s722, 4
          %s735 = int_to_ptr.vmem [resolvable:$true] %s734
          %740 = dma.vmem_to_hbm [thread:$0]  %s735, 256, %s733, %s719, 128, 128, 8
        $region64: #{tpu_custom_call.1} parent=43 // pred_fallthru
          _
      $region44: #{tpu_custom_call.1} parent=5 // pred_fallthru
        _
      %p741 = scmp.le.s32.totalorder 2, %s22
      // Predicated region
      $region65: #{tpu_custom_call.1} parent=5 // pred_check
        %p742 = pneg %p741
      $region66: #{tpu_custom_call.1} parent=5 // pred_check_branch
        %744 = sbr.rel (%p742) target = $region68
      $region67: #{tpu_custom_call.1} parent=5 // pred_region
        %s745 = ssub.s32 %s22, 2
        // Predicated region
        $region69: #{tpu_custom_call.1} parent=67 // pred_check
          %p746 = pneg %p205
        $region70: #{tpu_custom_call.1} parent=67 // pred_check_branch
          %748 = sbr.rel (%p746) target = $region72
        $region71: #{tpu_custom_call.1} parent=67 // pred_region
          %s749 = sand.u32 %s190, 1
          %s750 = scalar_lea.sflag [#allocation4], %s749
          %s751 = sand.u32 %s190, 1
          %s752 = smul.addr %s751, 16
          %s753 = scalar_lea.vmem [#allocation10], %s752
          %754 = dma.done %s750, 256
        $region72: #{tpu_custom_call.1} parent=67 // pred_fallthru
          _
      $region68: #{tpu_custom_call.1} parent=5 // pred_fallthru
        _
    $region6: #{tpu_custom_call.1} parent=1 // loop_footer
      %s26 = sadd.s32 1, %s22
    $region7: #{tpu_custom_call.1} parent=1 // loop_footer_branch
      %21 = sbr.rel target = $region3
    $region8: #{tpu_custom_call.1} parent=1 // loop_exit
      _
    %755 = vsyncpa [#allocation3], 1
    %s756 = scalar_lea.sflag [#allocation3], 1
    %757 = vsyncpa %s756, 1
    %758 = vsyncpa [#allocation6], 1
    %s759 = scalar_lea.sflag [#allocation6], 1
    %760 = vsyncpa %s759, 1
    %761 = vsyncpa [#allocation9], 1
    %762 = vsyncpa [#allocation4], 1
    %s763 = scalar_lea.sflag [#allocation4], 1
    %764 = vsyncpa %s763, 1

</llo_original>
